<compile_context>
chip_gen: v6e
topology: v6e:2x2x1
jax: 0.10.0
libtpu: 0.0.40
codegen_flags: <defaults>
</compile_context>

<pallas_src>
import jax
import jax.numpy as jnp
from jax.experimental import pallas as pl
from jax.experimental.pallas import tpu as pltpu

HIDDEN = 256
LANE = 128


def _round_up(x, m):
    return ((x + m - 1) // m) * m


def _cdiv(a, b):
    return -(-a // b)


# ----------------------------------------------------------------------------
# Kernel: whole 3-layer MLP for one batch tile, weights resident in VMEM.
# ----------------------------------------------------------------------------
def actor_kernel(s_ref, w1_ref, b1_ref, w2_ref, b2_ref, w3_ref, b3_ref, o_ref):
    x = s_ref[...]  # bf16 (block_b, state_dim)

    # Layer 1: Linear + ReLU (bf16 MXU operands, f32 accumulate/epilogue)
    h = jnp.dot(x, w1_ref[...], preferred_element_type=jnp.float32) + b1_ref[...]
    h = jnp.maximum(h, 0.0)

    # Layer 2: Linear + ReLU
    h = jnp.dot(h.astype(jnp.bfloat16), w2_ref[...],
                preferred_element_type=jnp.float32) + b2_ref[...]
    h = jnp.maximum(h, 0.0)

    # Layer 3: Linear + tanh (output columns zero-padded to a 128-lane slab)
    h = jnp.dot(h.astype(jnp.bfloat16), w3_ref[...],
                preferred_element_type=jnp.float32) + b3_ref[...]
    o_ref[...] = jnp.tanh(h).astype(o_ref.dtype)


# ----------------------------------------------------------------------------
# One-time parameter packing (outside the per-call jit).
# ----------------------------------------------------------------------------
def prepare_actor_params(params):
    """Pre-cast weights to bf16 and pre-pad layer-3 to a 128-lane slab.

    Returns (packed_params, action_dim).  Do this once; actor_forward then
    performs no per-call weight casts/pads.
    """
    w1, b1, w2, b2, w3, b3 = params
    action_dim = w3.shape[1]
    out_dim = _round_up(action_dim, LANE)
    pad_n = out_dim - action_dim
    w3_p = jnp.pad(w3, ((0, 0), (0, pad_n))) if pad_n else w3
    b3_p = jnp.pad(b3, ((0, 0), (0, pad_n))) if pad_n else b3
    packed = (
        w1.astype(jnp.bfloat16), b1.astype(jnp.float32),
        w2.astype(jnp.bfloat16), b2.astype(jnp.float32),
        w3_p.astype(jnp.bfloat16), b3_p.astype(jnp.float32),
    )
    return packed, action_dim


def _pick_block_b(batch):
    """Batch tile size.

    <=128 rows: one 128-row tile (minimum MXU-friendly tile).
    Otherwise split into ~2 even tiles (keeps both v7x TCs busy for any batch
    up to 2048) with a 1024-row cap; VMEM footprint stays far below limits on
    all generations.
    """
    if batch <= 128:
        return 128
    return min(_round_up(_cdiv(batch, 2), 128), 1024)


# ----------------------------------------------------------------------------
# Forward pass.
# ----------------------------------------------------------------------------
@jax.jit
def actor_forward_padded(s, packed_params):
    """Run the Actor MLP; returns the (padded_b, 128*k) bf16 output slab."""
    w1, b1, w2, b2, w3, b3 = packed_params
    batch, state_dim = s.shape
    out_dim = w3.shape[1]

    block_b = _pick_block_b(batch)
    padded_b = _round_up(batch, block_b)
    grid = (padded_b // block_b,)

    # Only per-call prep: cast/pad the (tiny) state tensor.
    s_bf = s.astype(jnp.bfloat16)
    pad_b = padded_b - batch
    if pad_b:
        s_bf = jnp.pad(s_bf, ((0, pad_b), (0, 0)))

    def whole(arr):
        shp = arr.shape
        return pl.BlockSpec(shp, lambda i: (0,) * len(shp))

    out = pl.pallas_call(
        actor_kernel,
        out_shape=jax.ShapeDtypeStruct((padded_b, out_dim), jnp.bfloat16),
        grid_spec=pltpu.PrefetchScalarGridSpec(
            num_scalar_prefetch=0,
            grid=grid,
            in_specs=[
                pl.BlockSpec((block_b, state_dim), lambda i: (i, 0)),  # s tile
                whole(w1), whole(b1),
                whole(w2), whole(b2),
                whole(w3), whole(b3),
            ],
            out_specs=pl.BlockSpec((block_b, out_dim), lambda i: (i, 0)),
        ),
        compiler_params=pltpu.CompilerParams(
            dimension_semantics=("parallel",)),
    )(s_bf, w1, b1, w2, b2, w3, b3)

    return out


def actor_forward(s, packed_params, action_dim):
    """Convenience wrapper: narrow the padded slab to (batch, action_dim)."""
    out = actor_forward_padded(s, packed_params)
    return out[: s.shape[0], :action_dim]


# ----------------------------------------------------------------------------
# Parameter init + pure-JAX references for verification.
# ----------------------------------------------------------------------------
def init_actor_params(key, state_dim, action_dim):
    """Mimics PyTorch's default Linear init: U(-1/sqrt(fan_in), 1/sqrt(fan_in)).
    Weights stored as (in, out)."""
    def linear(k, fan_in, fan_out):
        kw, kb = jax.random.split(k)
        bound = 1.0 / jnp.sqrt(fan_in)
        w = jax.random.uniform(kw, (fan_in, fan_out), jnp.float32, -bound, bound)
        b = jax.random.uniform(kb, (1, fan_out), jnp.float32, -bound, bound)
        return w, b

    k1, k2, k3 = jax.random.split(key, 3)
    w1, b1 = linear(k1, state_dim, HIDDEN)
    w2, b2 = linear(k2, HIDDEN, HIDDEN)
    w3, b3 = linear(k3, HIDDEN, action_dim)
    return (w1, b1, w2, b2, w3, b3)


def actor_reference_f32(s, params):
    """Pure-JAX f32 reference (matches the PyTorch module semantics)."""
    w1, b1, w2, b2, w3, b3 = params
    h = jnp.maximum(s @ w1 + b1, 0.0)
    h = jnp.maximum(h @ w2 + b2, 0.0)
    return jnp.tanh(h @ w3 + b3)


def actor_reference_bf16(s, params):
    """Pure-JAX reference using the same bf16 matmul operands as the kernel."""
    w1, b1, w2, b2, w3, b3 = params
    bf = jnp.bfloat16
    h = jnp.dot(s.astype(bf), w1.astype(bf),
                preferred_element_type=jnp.float32) + b1
    h = jnp.maximum(h, 0.0)
    h = jnp.dot(h.astype(bf), w2.astype(bf),
                preferred_element_type=jnp.float32) + b2
    h = jnp.maximum(h, 0.0)
    h = jnp.dot(h.astype(bf), w3.astype(bf),
                preferred_element_type=jnp.float32) + b3
    return jnp.tanh(h)


if __name__ == "__main__":
    key = jax.random.PRNGKey(0)
    k_param, k_state = jax.random.split(key)

    batch = 2
    state_dim = 16
    action_dim = 4

    params = init_actor_params(k_param, state_dim, action_dim)
    packed, adim = prepare_actor_params(params)
    s = jax.random.normal(k_state, (batch, state_dim), jnp.float32)

    out = actor_forward(s, packed, adim)
    out = jax.block_until_ready(out)
    assert out.shape == (batch, action_dim)

    out_f32 = out.astype(jnp.float32)

    # Tight check vs. a reference using identical bf16 matmul inputs
    # (extra slack for the bf16 output cast).
    ref_bf16 = actor_reference_bf16(s, params)
    assert jnp.allclose(out_f32, ref_bf16, atol=2e-2, rtol=2e-2), \
        "mismatch vs bf16 ref"

    # Loose semantic check vs. the full-f32 PyTorch-equivalent reference.
    # NOTE: the kernel is intentionally a bf16-matmul approximation of the f32
    # PyTorch module; tanh saturation keeps the output error small.
    ref_f32 = actor_reference_f32(s, params)
    assert jnp.allclose(out_f32, ref_f32, atol=5e-2, rtol=5e-2), \
        "mismatch vs f32 ref"

    print("KERNEL_OK")
</pallas_src>

<mosaic_0001>
module attributes {stable_mosaic.version = 11 : i64} {
  func.func @actor_kernel(%arg0: i32, %arg1: memref<128x16xbf16, #tpu.memory_space<vmem>>, %arg2: memref<16x256xbf16, #tpu.memory_space<vmem>>, %arg3: memref<1x256xf32, #tpu.memory_space<vmem>>, %arg4: memref<256x256xbf16, #tpu.memory_space<vmem>>, %arg5: memref<1x256xf32, #tpu.memory_space<vmem>>, %arg6: memref<256x128xbf16, #tpu.memory_space<vmem>>, %arg7: memref<1x128xf32, #tpu.memory_space<vmem>>, %arg8: memref<128x128xbf16, #tpu.memory_space<vmem>>) attributes {dimension_semantics = [#tpu.dimension_semantics<parallel>], iteration_bounds = array<i64: 1>, scalar_prefetch = 0 : i64, scratch_operands = 0 : i64, tpu.core_type = #tpu.core_type<tc>, window_params = [{transform_indices = @transform_0, window_bounds = array<i64: 128, 16>}, {pipeline_mode = #tpu.pipeline_mode<synchronous>, transform_indices = @transform_1, window_bounds = array<i64: 16, 256>}, {pipeline_mode = #tpu.pipeline_mode<synchronous>, transform_indices = @transform_2, window_bounds = array<i64: 1, 256>}, {pipeline_mode = #tpu.pipeline_mode<synchronous>, transform_indices = @transform_3, window_bounds = array<i64: 256, 256>}, {pipeline_mode = #tpu.pipeline_mode<synchronous>, transform_indices = @transform_4, window_bounds = array<i64: 1, 256>}, {pipeline_mode = #tpu.pipeline_mode<synchronous>, transform_indices = @transform_5, window_bounds = array<i64: 256, 128>}, {pipeline_mode = #tpu.pipeline_mode<synchronous>, transform_indices = @transform_6, window_bounds = array<i64: 1, 128>}, {transform_indices = @transform_7, window_bounds = array<i64: 128, 128>}]} {
    %c0 = arith.constant 0 : index
    %c0_0 = arith.constant 0 : index
    %0 = vector.load %arg1[%c0, %c0_0] : memref<128x16xbf16, #tpu.memory_space<vmem>>, vector<128x16xbf16>
    %c0_1 = arith.constant 0 : index
    %c0_2 = arith.constant 0 : index
    %1 = vector.load %arg2[%c0_1, %c0_2] : memref<16x256xbf16, #tpu.memory_space<vmem>>, vector<16x256xbf16>
    %cst = arith.constant dense<0.000000e+00> : vector<128x256xf32>
    %2 = tpu.matmul %0, %1, %cst {dimension_numbers = #tpu.dot_dimension_numbers<[1], [0], [0], [1], [0, 0, 1, 1], [], []>} : vector<128x16xbf16>, vector<16x256xbf16>, vector<128x256xf32> -> vector<128x256xf32>
    %c0_3 = arith.constant 0 : index
    %c0_4 = arith.constant 0 : index
    %3 = vector.load %arg3[%c0_3, %c0_4] : memref<1x256xf32, #tpu.memory_space<vmem>>, vector<1x256xf32>
    %4 = vector.broadcast %3 : vector<1x256xf32> to vector<128x256xf32>
    %5 = arith.addf %2, %4 : vector<128x256xf32>
    %cst_5 = arith.constant 0.000000e+00 : f32
    %6 = vector.broadcast %cst_5 : f32 to vector<128x256xf32>
    %7 = arith.maximumf %5, %6 : vector<128x256xf32>
    %8 = arith.truncf %7 : vector<128x256xf32> to vector<128x256xbf16>
    %c0_6 = arith.constant 0 : index
    %c0_7 = arith.constant 0 : index
    %9 = vector.load %arg4[%c0_6, %c0_7] : memref<256x256xbf16, #tpu.memory_space<vmem>>, vector<256x256xbf16>
    %cst_8 = arith.constant dense<0.000000e+00> : vector<128x256xf32>
    %10 = tpu.matmul %8, %9, %cst_8 {dimension_numbers = #tpu.dot_dimension_numbers<[1], [0], [0], [1], [0, 0, 1, 1], [], []>} : vector<128x256xbf16>, vector<256x256xbf16>, vector<128x256xf32> -> vector<128x256xf32>
    %c0_9 = arith.constant 0 : index
    %c0_10 = arith.constant 0 : index
    %11 = vector.load %arg5[%c0_9, %c0_10] : memref<1x256xf32, #tpu.memory_space<vmem>>, vector<1x256xf32>
    %12 = vector.broadcast %11 : vector<1x256xf32> to vector<128x256xf32>
    %13 = arith.addf %10, %12 : vector<128x256xf32>
    %cst_11 = arith.constant 0.000000e+00 : f32
    %14 = vector.broadcast %cst_11 : f32 to vector<128x256xf32>
    %15 = arith.maximumf %13, %14 : vector<128x256xf32>
    %16 = arith.truncf %15 : vector<128x256xf32> to vector<128x256xbf16>
    %c0_12 = arith.constant 0 : index
    %c0_13 = arith.constant 0 : index
    %17 = vector.load %arg6[%c0_12, %c0_13] : memref<256x128xbf16, #tpu.memory_space<vmem>>, vector<256x128xbf16>
    %cst_14 = arith.constant dense<0.000000e+00> : vector<128x128xf32>
    %18 = tpu.matmul %16, %17, %cst_14 {dimension_numbers = #tpu.dot_dimension_numbers<[1], [0], [0], [1], [0, 0, 1, 1], [], []>} : vector<128x256xbf16>, vector<256x128xbf16>, vector<128x128xf32> -> vector<128x128xf32>
    %c0_15 = arith.constant 0 : index
    %c0_16 = arith.constant 0 : index
    %19 = vector.load %arg7[%c0_15, %c0_16] : memref<1x128xf32, #tpu.memory_space<vmem>>, vector<1x128xf32>
    %20 = vector.broadcast %19 : vector<1x128xf32> to vector<128x128xf32>
    %21 = arith.addf %18, %20 : vector<128x128xf32>
    %22 = math.tanh %21 : vector<128x128xf32>
    %23 = arith.truncf %22 : vector<128x128xf32> to vector<128x128xbf16>
    %c0_17 = arith.constant 0 : index
    %c0_18 = arith.constant 0 : index
    %24 = vector.load %arg8[%c0_17, %c0_18] : memref<128x128xbf16, #tpu.memory_space<vmem>>, vector<128x128xbf16>
    tpu.vector_store %arg8[%c0_17, %c0_18], %23 {strides = array<i32>} : memref<128x128xbf16, #tpu.memory_space<vmem>>, vector<128x128xbf16>,
    return
  }
  func.func @transform_0(%arg0: i32) -> (i32, i32) {
    %c0_i32 = arith.constant 0 : i32
    %c0_i32_0 = arith.constant 0 : i32
    return %arg0, %c0_i32 : i32, i32
  }
  func.func @transform_1(%arg0: i32) -> (i32, i32) {
    %c0_i32 = arith.constant 0 : i32
    %c0_i32_0 = arith.constant 0 : i32
    %c0_i32_1 = arith.constant 0 : i32
    return %c0_i32, %c0_i32_0 : i32, i32
  }
  func.func @transform_2(%arg0: i32) -> (i32, i32) {
    %c0_i32 = arith.constant 0 : i32
    %c0_i32_0 = arith.constant 0 : i32
    %c0_i32_1 = arith.constant 0 : i32
    return %c0_i32, %c0_i32_0 : i32, i32
  }
  func.func @transform_3(%arg0: i32) -> (i32, i32) {
    %c0_i32 = arith.constant 0 : i32
    %c0_i32_0 = arith.constant 0 : i32
    %c0_i32_1 = arith.constant 0 : i32
    return %c0_i32, %c0_i32_0 : i32, i32
  }
  func.func @transform_4(%arg0: i32) -> (i32, i32) {
    %c0_i32 = arith.constant 0 : i32
    %c0_i32_0 = arith.constant 0 : i32
    %c0_i32_1 = arith.constant 0 : i32
    return %c0_i32, %c0_i32_0 : i32, i32
  }
  func.func @transform_5(%arg0: i32) -> (i32, i32) {
    %c0_i32 = arith.constant 0 : i32
    %c0_i32_0 = arith.constant 0 : i32
    %c0_i32_1 = arith.constant 0 : i32
    return %c0_i32, %c0_i32_0 : i32, i32
  }
  func.func @transform_6(%arg0: i32) -> (i32, i32) {
    %c0_i32 = arith.constant 0 : i32
    %c0_i32_0 = arith.constant 0 : i32
    %c0_i32_1 = arith.constant 0 : i32
    return %c0_i32, %c0_i32_0 : i32, i32
  }
  func.func @transform_7(%arg0: i32) -> (i32, i32) {
    %c0_i32 = arith.constant 0 : i32
    %c0_i32_0 = arith.constant 0 : i32
    return %arg0, %c0_i32 : i32, i32
  }
}

</mosaic_0001>

<llo_original>
// kernel: actor_forward_padded.1
$region0: #{actor_forward_padded.1}
  #allocation0 [shape = 'u32[]', space=smem, size = 0x4, offset = 0x4, fixed_abs, tag = 'smem constant byte address 0x4 - core index']
  #allocation1 [shape = 'u32[144,128]{1,0:T(1,128)}', space=vmem, size = 0x12000, scoped, tag = 'internal scratch']
  %s0 = inlined_call_operand.vmem [shape: bf16[128,16], index: 0, kind: input, shape index: {}]
  %s1 = inlined_call_operand.vmem [shape: bf16[16,256], index: 1, kind: input, shape index: {}]
  %s2 = inlined_call_operand.vmem [shape: f32[1,256], index: 2, kind: input, shape index: {}]
  %s3 = inlined_call_operand.hbm [shape: bf16[256,256], index: 3, kind: input, shape index: {}]
  %s4 = inlined_call_operand.vmem [shape: f32[1,256], index: 4, kind: input, shape index: {}]
  %s5 = inlined_call_operand.hbm [shape: bf16[256,128], index: 5, kind: input, shape index: {}]
  %s6 = inlined_call_operand.vmem [shape: f32[1,128], index: 6, kind: input, shape index: {}]
  %s7 = inlined_call_operand.hbm [shape: bf16[128,128], index: 7, kind: output, shape index: {}]
  %s8 = sld [smem:[#allocation0]]
  $region46: #{actor_forward_padded.1} parent=0
    _
  %s10 = ssub.s32 1, %s8
  %s11 = scalar_select 0, %s10, %s8
  $region1: #{actor_forward_padded.1} parent=0
    #allocation2 [shape = 'u8[131072]{0}', space=vmem, size = 0x20000, scoped, tag = 'input window, operand 3, single buffered']
    #allocation3 [shape = 's32[1]{0}', space=sflag, size = 0x4, scoped, tag = 'scoped memory for actor_forward_padded.1']
    #allocation4 [shape = 's32[1]{0}', space=sflag, size = 0x4, scoped, tag = 'scoped memory for actor_forward_padded.1']
    #allocation5 [shape = 'u8[65536]{0}', space=vmem, size = 0x10000, scoped, tag = 'input window, operand 5, single buffered']
    #allocation6 [shape = 's32[1]{0}', space=sflag, size = 0x4, scoped, tag = 'scoped memory for actor_forward_padded.1']
    #allocation7 [shape = 'u8[32768]{0}', space=vmem, size = 0x8000, scoped, tag = 'output window, operand 0, single buffered']
    %12 = vsyncpa [#allocation3], 0
    %13 = vsyncpa [#allocation6], 0
    %14 = vsyncpa [#allocation4], 0
    // Predicated region
    $region2: #{actor_forward_padded.1} parent=1 // pred_check
      _
    $region3: #{actor_forward_padded.1} parent=1 // pred_check_branch
      %16 = sbr.rel (0) target = $region5
    $region4: #{actor_forward_padded.1} parent=1 // pred_region
      _
    $region5: #{actor_forward_padded.1} parent=1 // pred_fallthru
      _
    // Predicated region
    $region6: #{actor_forward_padded.1} parent=1 // pred_check
      _
    $region7: #{actor_forward_padded.1} parent=1 // pred_check_branch
      %18 = sbr.rel (0) target = $region9
    $region8: #{actor_forward_padded.1} parent=1 // pred_region
      _
    $region9: #{actor_forward_padded.1} parent=1 // pred_fallthru
      _
    // Predicated region
    $region10: #{actor_forward_padded.1} parent=1 // pred_check
      _
    $region11: #{actor_forward_padded.1} parent=1 // pred_check_branch
      %20 = sbr.rel (0) target = $region13
    $region12: #{actor_forward_padded.1} parent=1 // pred_region
      _
    $region13: #{actor_forward_padded.1} parent=1 // pred_fallthru
      _
    // Predicated region
    $region14: #{actor_forward_padded.1} parent=1 // pred_check
      _
    $region15: #{actor_forward_padded.1} parent=1 // pred_check_branch
      %22 = sbr.rel (0) target = $region17
    $region16: #{actor_forward_padded.1} parent=1 // pred_region
      %s24 = ssub.s32 4096, 4096
      %25 = vsyncadd [#allocation3], %s24
      %s26 = sshll.u32 [#allocation2], 4
      %s27 = int_to_ptr.vmem [resolvable:$true] %s26
      %32 = dma.hbm_to_vmem [thread:$0]  %s3, 4096, %s27, [#allocation3], 128, 128, 8
    $region17: #{actor_forward_padded.1} parent=1 // pred_fallthru
      _
    // Predicated region
    $region18: #{actor_forward_padded.1} parent=1 // pred_check
      _
    $region19: #{actor_forward_padded.1} parent=1 // pred_check_branch
      %34 = sbr.rel (0) target = $region21
    $region20: #{actor_forward_padded.1} parent=1 // pred_region
      _
    $region21: #{actor_forward_padded.1} parent=1 // pred_fallthru
      _
    // Predicated region
    $region22: #{actor_forward_padded.1} parent=1 // pred_check
      _
    $region23: #{actor_forward_padded.1} parent=1 // pred_check_branch
      %36 = sbr.rel (0) target = $region25
    $region24: #{actor_forward_padded.1} parent=1 // pred_region
      %s38 = ssub.s32 2048, 2048
      %39 = vsyncadd [#allocation6], %s38
      %s40 = sshll.u32 [#allocation5], 4
      %s41 = int_to_ptr.vmem [resolvable:$true] %s40
      %46 = dma.hbm_to_vmem [thread:$0]  %s5, 2048, %s41, [#allocation6], 64, 64, 4
    $region25: #{actor_forward_padded.1} parent=1 // pred_fallthru
      _
    // Predicated region
    $region26: #{actor_forward_padded.1} parent=1 // pred_check
      _
    $region27: #{actor_forward_padded.1} parent=1 // pred_check_branch
      %48 = sbr.rel (0) target = $region29
    $region28: #{actor_forward_padded.1} parent=1 // pred_region
      _
    $region29: #{actor_forward_padded.1} parent=1 // pred_fallthru
      _
    // Predicated region
    $region30: #{actor_forward_padded.1} parent=1 // pred_check
      _
    $region31: #{actor_forward_padded.1} parent=1 // pred_check_branch
      %50 = sbr.rel (0) target = $region33
    $region32: #{actor_forward_padded.1} parent=1 // pred_region
      %51 = dma.done [#allocation3], 4096
    $region33: #{actor_forward_padded.1} parent=1 // pred_fallthru
      _
    // Predicated region
    $region34: #{actor_forward_padded.1} parent=1 // pred_check
      _
    $region35: #{actor_forward_padded.1} parent=1 // pred_check_branch
      %53 = sbr.rel (0) target = $region37
    $region36: #{actor_forward_padded.1} parent=1 // pred_region
      %54 = dma.done [#allocation6], 2048
    $region37: #{actor_forward_padded.1} parent=1 // pred_fallthru
      _
    %v56 = vld [vmem:[%s0] sm:$0xf]
    %v57 = vld [vmem:[%s0 + $0x4] sm:$0xf]
    %v58 = vld [vmem:[%s0 + $0x8] sm:$0xf]
    %v59 = vld [vmem:[%s0 + $0xc] sm:$0xf]
    %v60 = vld [vmem:[%s0 + $0x10] sm:$0xf]
    %v61 = vld [vmem:[%s0 + $0x14] sm:$0xf]
    %v62 = vld [vmem:[%s0 + $0x18] sm:$0xf]
    %v63 = vld [vmem:[%s0 + $0x1c] sm:$0xf]
    %v64 = vld [vmem:[%s0 + $0x20] sm:$0xf]
    %v65 = vld [vmem:[%s0 + $0x24] sm:$0xf]
    %v66 = vld [vmem:[%s0 + $0x28] sm:$0xf]
    %v67 = vld [vmem:[%s0 + $0x2c] sm:$0xf]
    %v68 = vld [vmem:[%s0 + $0x30] sm:$0xf]
    %v69 = vld [vmem:[%s0 + $0x34] sm:$0xf]
    %v70 = vld [vmem:[%s0 + $0x38] sm:$0xf]
    %v71 = vld [vmem:[%s0 + $0x3c] sm:$0xf]
    %v72 = vld [vmem:[%s1] sm:$0xff]
    %v73 = vld [vmem:[%s1 + $0x8] sm:$0xff]
    %v74 = vld [vmem:[%s2] sm:$0x3]
    %v76 = vlaneseq
    %v77 = vshrl.u32 %v76, 7
    %v78 = vsub.s32 0, %v77
    %v79 = vrot.slane %v74, %v78
    %v80 = vlaneseq
    %v81 = vshrl.u32 %v80, 7
    %v82 = vsub.s32 1, %v81
    %v83 = vrot.slane %v74, %v82
    %v102 = vunpack.c.l.b16 %v56
    %v103 = vunpack.c.l.b16 %v57
    %v104 = vunpack.c.l.b16 %v58
    %v105 = vunpack.c.l.b16 %v59
    %v106 = vunpack.c.l.b16 %v60
    %v107 = vunpack.c.l.b16 %v61
    %v108 = vunpack.c.l.b16 %v62
    %v109 = vunpack.c.l.b16 %v63
    %v110 = vunpack.c.l.b16 %v64
    %v111 = vunpack.c.l.b16 %v65
    %v112 = vunpack.c.l.b16 %v66
    %v113 = vunpack.c.l.b16 %v67
    %v114 = vunpack.c.l.b16 %v68
    %v115 = vunpack.c.l.b16 %v69
    %v116 = vunpack.c.l.b16 %v70
    %v117 = vunpack.c.l.b16 %v71
    %v118 = vpack.c.b16 %v103, %v102
    %v119 = vpack.c.b16 %v105, %v104
    %v120 = vpack.c.b16 %v107, %v106
    %v121 = vpack.c.b16 %v109, %v108
    %v122 = vpack.c.b16 %v111, %v110
    %v123 = vpack.c.b16 %v113, %v112
    %v124 = vpack.c.b16 %v115, %v114
    %v125 = vpack.c.b16 %v117, %v116
    %v128 = vunpack.c.l.b16 %v72
    %v129 = vunpack.c.h.b16 %v72
    %v130 = vunpack.c.l.b16 %v73
    %v131 = vunpack.c.h.b16 %v73
    %v132 = vpack.c.b16 %v130, %v128
    %v133 = vpack.c.b16 %v131, %v129
    %vm136 = vcmask 130048
    %v138 = vsel %vm136, %v118, 0
    %v141 = vsel %vm136, %v119, 0
    %v144 = vsel %vm136, %v120, 0
    %v147 = vsel %vm136, %v121, 0
    %v150 = vsel %vm136, %v122, 0
    %v153 = vsel %vm136, %v123, 0
    %v156 = vsel %vm136, %v124, 0
    %v159 = vsel %vm136, %v125, 0
    %161 = vmatprep.subr.bf16.mxu0 0
    %162 = vmatpush1.bf16.msra.mxu0 0
    %163 = vmatprep.subr.bf16.mxu0 0
    %164 = vmatpush1.bf16.msra.mxu0 0
    %165 = vmatprep.subr.bf16.mxu0 0
    %166 = vmatpush1.bf16.msra.mxu0 0
    %167 = vmatprep.subr.bf16.mxu0 0
    %168 = vmatpush1.bf16.msra.mxu0 0
    %169 = vmatprep.subr.bf16.mxu0 0
    %170 = vmatpush1.bf16.msra.mxu0 0
    %171 = vmatprep.subr.bf16.mxu0 0
    %172 = vmatpush1.bf16.msra.mxu0 0
    %173 = vmatprep.subr.bf16.mxu0 0
    %174 = vmatpush1.bf16.msra.mxu0 0
    %175 = vmatprep.subr.bf16.mxu0 %v133
    %176 = vmatpush1.bf16.msra.mxu0 %v132
    %177 = vmatprep.subr.bf16.mxu0 0
    %178 = vmatpush2.bf16.msra.mxu0 0
    %179 = vmatprep.subr.bf16.mxu0 0
    %180 = vmatpush2.bf16.msra.mxu0 0
    %181 = vmatprep.subr.bf16.mxu0 0
    %182 = vmatpush2.bf16.msra.mxu0 0
    %183 = vmatprep.subr.bf16.mxu0 0
    %184 = vmatpush2.bf16.msra.mxu0 0
    %185 = vmatprep.subr.bf16.mxu0 0
    %186 = vmatpush2.bf16.msra.mxu0 0
    %187 = vmatprep.subr.bf16.mxu0 0
    %188 = vmatpush2.bf16.msra.mxu0 0
    %189 = vmatprep.subr.bf16.mxu0 0
    %190 = vmatpush2.bf16.msra.mxu0 0
    %191 = vmatprep.subr.bf16.mxu0 0
    %192 = vmatpush2.bf16.msra.mxu0 0
    %193 = vmatprep.mubr.bf16.mxu0 0
    %194 = vmatmul.mubr.bf16.gmra.mxu0 %v138
    %v195 = vpop.f32.mrf.mxu0
    %v196 = vadd.f32 %v79, %v195
    %v197 = vpop.f32.mrf.mxu0
    %v198 = vadd.f32 %v83, %v197
    %v199 = vpop.f32.mrf.mxu0
    %v200 = vadd.f32 %v79, %v199
    %v201 = vpop.f32.mrf.mxu0
    %v202 = vadd.f32 %v83, %v201
    %203 = vmatprep.mubr.bf16.mxu0 0
    %204 = vmatmul.mubr.bf16.gmra.mxu0 %v141
    %v205 = vpop.f32.mrf.mxu0
    %v206 = vadd.f32 %v79, %v205
    %v207 = vpop.f32.mrf.mxu0
    %v208 = vadd.f32 %v83, %v207
    %v209 = vpop.f32.mrf.mxu0
    %v210 = vadd.f32 %v79, %v209
    %v211 = vpop.f32.mrf.mxu0
    %v212 = vadd.f32 %v83, %v211
    %213 = vmatprep.mubr.bf16.mxu0 0
    %214 = vmatmul.mubr.bf16.gmra.mxu0 %v144
    %v215 = vpop.f32.mrf.mxu0
    %v216 = vadd.f32 %v79, %v215
    %v217 = vpop.f32.mrf.mxu0
    %v218 = vadd.f32 %v83, %v217
    %v219 = vpop.f32.mrf.mxu0
    %v220 = vadd.f32 %v79, %v219
    %v221 = vpop.f32.mrf.mxu0
    %v222 = vadd.f32 %v83, %v221
    %223 = vmatprep.mubr.bf16.mxu0 0
    %224 = vmatmul.mubr.bf16.gmra.mxu0 %v147
    %v225 = vpop.f32.mrf.mxu0
    %v226 = vadd.f32 %v79, %v225
    %v227 = vpop.f32.mrf.mxu0
    %v228 = vadd.f32 %v83, %v227
    %v229 = vpop.f32.mrf.mxu0
    %v230 = vadd.f32 %v79, %v229
    %v231 = vpop.f32.mrf.mxu0
    %v232 = vadd.f32 %v83, %v231
    %233 = vmatprep.mubr.bf16.mxu0 0
    %234 = vmatmul.mubr.bf16.gmra.mxu0 %v150
    %v235 = vpop.f32.mrf.mxu0
    %v236 = vadd.f32 %v79, %v235
    %v237 = vpop.f32.mrf.mxu0
    %v238 = vadd.f32 %v83, %v237
    %v239 = vpop.f32.mrf.mxu0
    %v240 = vadd.f32 %v79, %v239
    %v241 = vpop.f32.mrf.mxu0
    %v242 = vadd.f32 %v83, %v241
    %243 = vmatprep.mubr.bf16.mxu0 0
    %244 = vmatmul.mubr.bf16.gmra.mxu0 %v153
    %v245 = vpop.f32.mrf.mxu0
    %v246 = vadd.f32 %v79, %v245
    %v247 = vpop.f32.mrf.mxu0
    %v248 = vadd.f32 %v83, %v247
    %v249 = vpop.f32.mrf.mxu0
    %v250 = vadd.f32 %v79, %v249
    %v251 = vpop.f32.mrf.mxu0
    %v252 = vadd.f32 %v83, %v251
    %253 = vmatprep.mubr.bf16.mxu0 0
    %254 = vmatmul.mubr.bf16.gmra.mxu0 %v156
    %v255 = vpop.f32.mrf.mxu0
    %v256 = vadd.f32 %v79, %v255
    %v257 = vpop.f32.mrf.mxu0
    %v258 = vadd.f32 %v83, %v257
    %v259 = vpop.f32.mrf.mxu0
    %v260 = vadd.f32 %v79, %v259
    %v261 = vpop.f32.mrf.mxu0
    %v262 = vadd.f32 %v83, %v261
    %263 = vmatprep.mubr.bf16.mxu0 0
    %264 = vmatmul.mubr.bf16.gmra.mxu0 %v159
    %v265 = vpop.f32.mrf.mxu0
    %v266 = vadd.f32 %v79, %v265
    %v267 = vpop.f32.mrf.mxu0
    %v268 = vadd.f32 %v83, %v267
    %v269 = vpop.f32.mrf.mxu0
    %v270 = vadd.f32 %v79, %v269
    %v271 = vpop.f32.mrf.mxu0
    %v272 = vadd.f32 %v83, %v271
    %273 = vdwg.mxu0
    %v274 = vmax.f32 %v196, 0.0
    %v275 = vmax.f32 %v198, 0.0
    %v276 = vmax.f32 %v200, 0.0
    %v277 = vmax.f32 %v202, 0.0
    %v278 = vmax.f32 %v206, 0.0
    %v279 = vmax.f32 %v208, 0.0
    %v280 = vmax.f32 %v210, 0.0
    %v281 = vmax.f32 %v212, 0.0
    %v282 = vmax.f32 %v216, 0.0
    %v283 = vmax.f32 %v218, 0.0
    %v284 = vmax.f32 %v220, 0.0
    %v285 = vmax.f32 %v222, 0.0
    %v286 = vmax.f32 %v226, 0.0
    %v287 = vmax.f32 %v228, 0.0
    %v288 = vmax.f32 %v230, 0.0
    %v289 = vmax.f32 %v232, 0.0
    %v290 = vmax.f32 %v236, 0.0
    %v291 = vmax.f32 %v238, 0.0
    %v292 = vmax.f32 %v240, 0.0
    %v293 = vmax.f32 %v242, 0.0
    %v294 = vmax.f32 %v246, 0.0
    %v295 = vmax.f32 %v248, 0.0
    %v296 = vmax.f32 %v250, 0.0
    %v297 = vmax.f32 %v252, 0.0
    %v298 = vmax.f32 %v256, 0.0
    %v299 = vmax.f32 %v258, 0.0
    %v300 = vmax.f32 %v260, 0.0
    %v301 = vmax.f32 %v262, 0.0
    %v302 = vmax.f32 %v266, 0.0
    %v303 = vmax.f32 %v268, 0.0
    %v304 = vmax.f32 %v270, 0.0
    %v305 = vmax.f32 %v272, 0.0
    %v306 = vpack.c.bf16 %v276, %v274
    %v307 = vpack.c.bf16 %v277, %v275
    %v308 = vpack.c.bf16 %v280, %v278
    %v309 = vpack.c.bf16 %v281, %v279
    %v310 = vpack.c.bf16 %v284, %v282
    %v311 = vpack.c.bf16 %v285, %v283
    %v312 = vpack.c.bf16 %v288, %v286
    %v313 = vpack.c.bf16 %v289, %v287
    %v314 = vpack.c.bf16 %v292, %v290
    %v315 = vpack.c.bf16 %v293, %v291
    %v316 = vpack.c.bf16 %v296, %v294
    %v317 = vpack.c.bf16 %v297, %v295
    %v318 = vpack.c.bf16 %v300, %v298
    %v319 = vpack.c.bf16 %v301, %v299
    %v320 = vpack.c.bf16 %v304, %v302
    %v321 = vpack.c.bf16 %v305, %v303
    %v322 = vld [vmem:[#allocation2] sm:$0xff]
    %v323 = vld [vmem:[#allocation2 + $0x8] sm:$0xff]
    %v324 = vld [vmem:[#allocation2 + $0x10] sm:$0xff]
    %v325 = vld [vmem:[#allocation2 + $0x18] sm:$0xff]
    %v326 = vld [vmem:[#allocation2 + $0x20] sm:$0xff]
    %v327 = vld [vmem:[#allocation2 + $0x28] sm:$0xff]
    %v328 = vld [vmem:[#allocation2 + $0x30] sm:$0xff]
    %v329 = vld [vmem:[#allocation2 + $0x38] sm:$0xff]
    %v330 = vld [vmem:[#allocation2 + $0x40] sm:$0xff]
    %v331 = vld [vmem:[#allocation2 + $0x48] sm:$0xff]
    %v332 = vld [vmem:[#allocation2 + $0x50] sm:$0xff]
    %v333 = vld [vmem:[#allocation2 + $0x58] sm:$0xff]
    %v334 = vld [vmem:[#allocation2 + $0x60] sm:$0xff]
    %v335 = vld [vmem:[#allocation2 + $0x68] sm:$0xff]
    %v336 = vld [vmem:[#allocation2 + $0x70] sm:$0xff]
    %v337 = vld [vmem:[#allocation2 + $0x78] sm:$0xff]
    %v338 = vld [vmem:[#allocation2 + $0x80] sm:$0xff]
    %v339 = vld [vmem:[#allocation2 + $0x88] sm:$0xff]
    %v340 = vld [vmem:[#allocation2 + $0x90] sm:$0xff]
    %v341 = vld [vmem:[#allocation2 + $0x98] sm:$0xff]
    %v342 = vld [vmem:[#allocation2 + $0xa0] sm:$0xff]
    %v343 = vld [vmem:[#allocation2 + $0xa8] sm:$0xff]
    %v344 = vld [vmem:[#allocation2 + $0xb0] sm:$0xff]
    %v345 = vld [vmem:[#allocation2 + $0xb8] sm:$0xff]
    %v346 = vld [vmem:[#allocation2 + $0xc0] sm:$0xff]
    %v347 = vld [vmem:[#allocation2 + $0xc8] sm:$0xff]
    %v348 = vld [vmem:[#allocation2 + $0xd0] sm:$0xff]
    %v349 = vld [vmem:[#allocation2 + $0xd8] sm:$0xff]
    %v350 = vld [vmem:[#allocation2 + $0xe0] sm:$0xff]
    %v351 = vld [vmem:[#allocation2 + $0xe8] sm:$0xff]
    %v352 = vld [vmem:[#allocation2 + $0xf0] sm:$0xff]
    %v353 = vld [vmem:[#allocation2 + $0xf8] sm:$0xff]
    %v354 = vld [vmem:[%s4] sm:$0x3]
    %v356 = vlaneseq
    %v357 = vshrl.u32 %v356, 7
    %v358 = vsub.s32 0, %v357
    %v359 = vrot.slane %v354, %v358
    %v360 = vlaneseq
    %v361 = vshrl.u32 %v360, 7
    %v362 = vsub.s32 1, %v361
    %v363 = vrot.slane %v354, %v362
    %v398 = vunpack.c.l.b16 %v322
    %v399 = vunpack.c.h.b16 %v322
    %v400 = vunpack.c.l.b16 %v323
    %v401 = vunpack.c.h.b16 %v323
    %v402 = vunpack.c.l.b16 %v324
    %v403 = vunpack.c.h.b16 %v324
    %v404 = vunpack.c.l.b16 %v325
    %v405 = vunpack.c.h.b16 %v325
    %v406 = vunpack.c.l.b16 %v326
    %v407 = vunpack.c.h.b16 %v326
    %v408 = vunpack.c.l.b16 %v327
    %v409 = vunpack.c.h.b16 %v327
    %v410 = vunpack.c.l.b16 %v328
    %v411 = vunpack.c.h.b16 %v328
    %v412 = vunpack.c.l.b16 %v329
    %v413 = vunpack.c.h.b16 %v329
    %v414 = vunpack.c.l.b16 %v330
    %v415 = vunpack.c.h.b16 %v330
    %v416 = vunpack.c.l.b16 %v331
    %v417 = vunpack.c.h.b16 %v331
    %v418 = vunpack.c.l.b16 %v332
    %v419 = vunpack.c.h.b16 %v332
    %v420 = vunpack.c.l.b16 %v333
    %v421 = vunpack.c.h.b16 %v333
    %v422 = vunpack.c.l.b16 %v334
    %v423 = vunpack.c.h.b16 %v334
    %v424 = vunpack.c.l.b16 %v335
    %v425 = vunpack.c.h.b16 %v335
    %v426 = vunpack.c.l.b16 %v336
    %v427 = vunpack.c.h.b16 %v336
    %v428 = vunpack.c.l.b16 %v337
    %v429 = vunpack.c.h.b16 %v337
    %v430 = vunpack.c.l.b16 %v338
    %v431 = vunpack.c.h.b16 %v338
    %v432 = vunpack.c.l.b16 %v339
    %v433 = vunpack.c.h.b16 %v339
    %v434 = vunpack.c.l.b16 %v340
    %v435 = vunpack.c.h.b16 %v340
    %v436 = vunpack.c.l.b16 %v341
    %v437 = vunpack.c.h.b16 %v341
    %v438 = vunpack.c.l.b16 %v342
    %v439 = vunpack.c.h.b16 %v342
    %v440 = vunpack.c.l.b16 %v343
    %v441 = vunpack.c.h.b16 %v343
    %v442 = vunpack.c.l.b16 %v344
    %v443 = vunpack.c.h.b16 %v344
    %v444 = vunpack.c.l.b16 %v345
    %v445 = vunpack.c.h.b16 %v345
    %v446 = vunpack.c.l.b16 %v346
    %v447 = vunpack.c.h.b16 %v346
    %v448 = vunpack.c.l.b16 %v347
    %v449 = vunpack.c.h.b16 %v347
    %v450 = vunpack.c.l.b16 %v348
    %v451 = vunpack.c.h.b16 %v348
    %v452 = vunpack.c.l.b16 %v349
    %v453 = vunpack.c.h.b16 %v349
    %v454 = vunpack.c.l.b16 %v350
    %v455 = vunpack.c.h.b16 %v350
    %v456 = vunpack.c.l.b16 %v351
    %v457 = vunpack.c.h.b16 %v351
    %v458 = vunpack.c.l.b16 %v352
    %v459 = vunpack.c.h.b16 %v352
    %v460 = vunpack.c.l.b16 %v353
    %v461 = vunpack.c.h.b16 %v353
    %v462 = vpack.c.b16 %v400, %v398
    %v463 = vpack.c.b16 %v401, %v399
    %v464 = vpack.c.b16 %v404, %v402
    %v465 = vpack.c.b16 %v405, %v403
    %v466 = vpack.c.b16 %v408, %v406
    %v467 = vpack.c.b16 %v409, %v407
    %v468 = vpack.c.b16 %v412, %v410
    %v469 = vpack.c.b16 %v413, %v411
    %v470 = vpack.c.b16 %v416, %v414
    %v471 = vpack.c.b16 %v417, %v415
    %v472 = vpack.c.b16 %v420, %v418
    %v473 = vpack.c.b16 %v421, %v419
    %v474 = vpack.c.b16 %v424, %v422
    %v475 = vpack.c.b16 %v425, %v423
    %v476 = vpack.c.b16 %v428, %v426
    %v477 = vpack.c.b16 %v429, %v427
    %v478 = vpack.c.b16 %v432, %v430
    %v479 = vpack.c.b16 %v433, %v431
    %v480 = vpack.c.b16 %v436, %v434
    %v481 = vpack.c.b16 %v437, %v435
    %v482 = vpack.c.b16 %v440, %v438
    %v483 = vpack.c.b16 %v441, %v439
    %v484 = vpack.c.b16 %v444, %v442
    %v485 = vpack.c.b16 %v445, %v443
    %v486 = vpack.c.b16 %v448, %v446
    %v487 = vpack.c.b16 %v449, %v447
    %v488 = vpack.c.b16 %v452, %v450
    %v489 = vpack.c.b16 %v453, %v451
    %v490 = vpack.c.b16 %v456, %v454
    %v491 = vpack.c.b16 %v457, %v455
    %v492 = vpack.c.b16 %v460, %v458
    %v493 = vpack.c.b16 %v461, %v459
    %526 = vmatprep.subr.bf16.mxu0 %v477
    %527 = vmatpush1.bf16.msra.mxu0 %v476
    %528 = vmatprep.subr.bf16.mxu0 %v475
    %529 = vmatpush1.bf16.msra.mxu0 %v474
    %530 = vmatprep.subr.bf16.mxu0 %v473
    %531 = vmatpush1.bf16.msra.mxu0 %v472
    %532 = vmatprep.subr.bf16.mxu0 %v471
    %533 = vmatpush1.bf16.msra.mxu0 %v470
    %534 = vmatprep.subr.bf16.mxu0 %v469
    %535 = vmatpush1.bf16.msra.mxu0 %v468
    %536 = vmatprep.subr.bf16.mxu0 %v467
    %537 = vmatpush1.bf16.msra.mxu0 %v466
    %538 = vmatprep.subr.bf16.mxu0 %v465
    %539 = vmatpush1.bf16.msra.mxu0 %v464
    %540 = vmatprep.subr.bf16.mxu0 %v463
    %541 = vmatpush1.bf16.msra.mxu0 %v462
    %542 = vmatprep.subr.bf16.mxu0 %v493
    %543 = vmatpush2.bf16.msra.mxu0 %v492
    %544 = vmatprep.subr.bf16.mxu0 %v491
    %545 = vmatpush2.bf16.msra.mxu0 %v490
    %546 = vmatprep.subr.bf16.mxu0 %v489
    %547 = vmatpush2.bf16.msra.mxu0 %v488
    %548 = vmatprep.subr.bf16.mxu0 %v487
    %549 = vmatpush2.bf16.msra.mxu0 %v486
    %550 = vmatprep.subr.bf16.mxu0 %v485
    %551 = vmatpush2.bf16.msra.mxu0 %v484
    %552 = vmatprep.subr.bf16.mxu0 %v483
    %553 = vmatpush2.bf16.msra.mxu0 %v482
    %554 = vmatprep.subr.bf16.mxu0 %v481
    %555 = vmatpush2.bf16.msra.mxu0 %v480
    %556 = vmatprep.subr.bf16.mxu0 %v479
    %557 = vmatpush2.bf16.msra.mxu0 %v478
    %558 = vmatprep.mubr.bf16.mxu0 %v307
    %559 = vmatmul.mubr.bf16.gmra.mxu0 %v306
    %v560 = vpop.f32.mrf.mxu0
    %v561 = vadd.f32 %v359, %v560
    %v562 = vpop.f32.mrf.mxu0
    %v563 = vadd.f32 %v363, %v562
    %v564 = vpop.f32.mrf.mxu0
    %v565 = vadd.f32 %v359, %v564
    %v566 = vpop.f32.mrf.mxu0
    %v567 = vadd.f32 %v363, %v566
    %568 = vmatprep.mubr.bf16.mxu0 %v309
    %569 = vmatmul.mubr.bf16.gmra.mxu0 %v308
    %v570 = vpop.f32.mrf.mxu0
    %v571 = vadd.f32 %v359, %v570
    %v572 = vpop.f32.mrf.mxu0
    %v573 = vadd.f32 %v363, %v572
    %v574 = vpop.f32.mrf.mxu0
    %v575 = vadd.f32 %v359, %v574
    %v576 = vpop.f32.mrf.mxu0
    %v577 = vadd.f32 %v363, %v576
    %578 = vmatprep.mubr.bf16.mxu0 %v311
    %579 = vmatmul.mubr.bf16.gmra.mxu0 %v310
    %v580 = vpop.f32.mrf.mxu0
    %v581 = vadd.f32 %v359, %v580
    %v582 = vpop.f32.mrf.mxu0
    %v583 = vadd.f32 %v363, %v582
    %v584 = vpop.f32.mrf.mxu0
    %v585 = vadd.f32 %v359, %v584
    %v586 = vpop.f32.mrf.mxu0
    %v587 = vadd.f32 %v363, %v586
    %588 = vmatprep.mubr.bf16.mxu0 %v313
    %589 = vmatmul.mubr.bf16.gmra.mxu0 %v312
    %v590 = vpop.f32.mrf.mxu0
    %v591 = vadd.f32 %v359, %v590
    %v592 = vpop.f32.mrf.mxu0
    %v593 = vadd.f32 %v363, %v592
    %v594 = vpop.f32.mrf.mxu0
    %v595 = vadd.f32 %v359, %v594
    %v596 = vpop.f32.mrf.mxu0
    %v597 = vadd.f32 %v363, %v596
    %598 = vmatprep.mubr.bf16.mxu0 %v315
    %599 = vmatmul.mubr.bf16.gmra.mxu0 %v314
    %v600 = vpop.f32.mrf.mxu0
    %v601 = vadd.f32 %v359, %v600
    %v602 = vpop.f32.mrf.mxu0
    %v603 = vadd.f32 %v363, %v602
    %v604 = vpop.f32.mrf.mxu0
    %v605 = vadd.f32 %v359, %v604
    %v606 = vpop.f32.mrf.mxu0
    %v607 = vadd.f32 %v363, %v606
    %608 = vmatprep.mubr.bf16.mxu0 %v317
    %609 = vmatmul.mubr.bf16.gmra.mxu0 %v316
    %v610 = vpop.f32.mrf.mxu0
    %v611 = vadd.f32 %v359, %v610
    %v612 = vpop.f32.mrf.mxu0
    %v613 = vadd.f32 %v363, %v612
    %v614 = vpop.f32.mrf.mxu0
    %v615 = vadd.f32 %v359, %v614
    %v616 = vpop.f32.mrf.mxu0
    %v617 = vadd.f32 %v363, %v616
    %618 = vmatprep.mubr.bf16.mxu0 %v319
    %619 = vmatmul.mubr.bf16.gmra.mxu0 %v318
    %v620 = vpop.f32.mrf.mxu0
    %v621 = vadd.f32 %v359, %v620
    %v622 = vpop.f32.mrf.mxu0
    %v623 = vadd.f32 %v363, %v622
    %v624 = vpop.f32.mrf.mxu0
    %v625 = vadd.f32 %v359, %v624
    %v626 = vpop.f32.mrf.mxu0
    %v627 = vadd.f32 %v363, %v626
    %628 = vmatprep.mubr.bf16.mxu0 %v321
    %629 = vmatmul.mubr.bf16.gmra.mxu0 %v320
    %v630 = vpop.f32.mrf.mxu0
    %v631 = vadd.f32 %v359, %v630
    %v632 = vpop.f32.mrf.mxu0
    %v633 = vadd.f32 %v363, %v632
    %v634 = vpop.f32.mrf.mxu0
    %v635 = vadd.f32 %v359, %v634
    %v636 = vpop.f32.mrf.mxu0
    %v637 = vadd.f32 %v363, %v636
    %638 = vdwg.mxu0
    %v639 = vmax.f32 %v561, 0.0
    %v640 = vmax.f32 %v563, 0.0
    %v641 = vmax.f32 %v565, 0.0
    %v642 = vmax.f32 %v567, 0.0
    %v643 = vmax.f32 %v571, 0.0
    %v644 = vmax.f32 %v573, 0.0
    %v645 = vmax.f32 %v575, 0.0
    %v646 = vmax.f32 %v577, 0.0
    %v647 = vmax.f32 %v581, 0.0
    %v648 = vmax.f32 %v583, 0.0
    %v649 = vmax.f32 %v585, 0.0
    %v650 = vmax.f32 %v587, 0.0
    %v651 = vmax.f32 %v591, 0.0
    %v652 = vmax.f32 %v593, 0.0
    %v653 = vmax.f32 %v595, 0.0
    %v654 = vmax.f32 %v597, 0.0
    %v655 = vmax.f32 %v601, 0.0
    %v656 = vmax.f32 %v603, 0.0
    %v657 = vmax.f32 %v605, 0.0
    %v658 = vmax.f32 %v607, 0.0
    %v659 = vmax.f32 %v611, 0.0
    %v660 = vmax.f32 %v613, 0.0
    %v661 = vmax.f32 %v615, 0.0
    %v662 = vmax.f32 %v617, 0.0
    %v663 = vmax.f32 %v621, 0.0
    %v664 = vmax.f32 %v623, 0.0
    %v665 = vmax.f32 %v625, 0.0
    %v666 = vmax.f32 %v627, 0.0
    %v667 = vmax.f32 %v631, 0.0
    %v668 = vmax.f32 %v633, 0.0
    %v669 = vmax.f32 %v635, 0.0
    %v670 = vmax.f32 %v637, 0.0
    %v671 = vpack.c.bf16 %v641, %v639
    %v672 = vpack.c.bf16 %v642, %v640
    %v673 = vpack.c.bf16 %v645, %v643
    %v674 = vpack.c.bf16 %v646, %v644
    %v675 = vpack.c.bf16 %v649, %v647
    %v676 = vpack.c.bf16 %v650, %v648
    %v677 = vpack.c.bf16 %v653, %v651
    %v678 = vpack.c.bf16 %v654, %v652
    %v679 = vpack.c.bf16 %v657, %v655
    %v680 = vpack.c.bf16 %v658, %v656
    %v681 = vpack.c.bf16 %v661, %v659
    %v682 = vpack.c.bf16 %v662, %v660
    %v683 = vpack.c.bf16 %v665, %v663
    %v684 = vpack.c.bf16 %v666, %v664
    %v685 = vpack.c.bf16 %v669, %v667
    %v686 = vpack.c.bf16 %v670, %v668
    %v687 = vld [vmem:[#allocation5] sm:$0xf]
    %v688 = vld [vmem:[#allocation5 + $0x4] sm:$0xf]
    %v689 = vld [vmem:[#allocation5 + $0x8] sm:$0xf]
    %v690 = vld [vmem:[#allocation5 + $0xc] sm:$0xf]
    %v691 = vld [vmem:[#allocation5 + $0x10] sm:$0xf]
    %v692 = vld [vmem:[#allocation5 + $0x14] sm:$0xf]
    %v693 = vld [vmem:[#allocation5 + $0x18] sm:$0xf]
    %v694 = vld [vmem:[#allocation5 + $0x1c] sm:$0xf]
    %v695 = vld [vmem:[#allocation5 + $0x20] sm:$0xf]
    %v696 = vld [vmem:[#allocation5 + $0x24] sm:$0xf]
    %v697 = vld [vmem:[#allocation5 + $0x28] sm:$0xf]
    %v698 = vld [vmem:[#allocation5 + $0x2c] sm:$0xf]
    %v699 = vld [vmem:[#allocation5 + $0x30] sm:$0xf]
    %v700 = vld [vmem:[#allocation5 + $0x34] sm:$0xf]
    %v701 = vld [vmem:[#allocation5 + $0x38] sm:$0xf]
    %v702 = vld [vmem:[#allocation5 + $0x3c] sm:$0xf]
    %v703 = vld [vmem:[#allocation5 + $0x40] sm:$0xf]
    %v704 = vld [vmem:[#allocation5 + $0x44] sm:$0xf]
    %v705 = vld [vmem:[#allocation5 + $0x48] sm:$0xf]
    %v706 = vld [vmem:[#allocation5 + $0x4c] sm:$0xf]
    %v707 = vld [vmem:[#allocation5 + $0x50] sm:$0xf]
    %v708 = vld [vmem:[#allocation5 + $0x54] sm:$0xf]
    %v709 = vld [vmem:[#allocation5 + $0x58] sm:$0xf]
    %v710 = vld [vmem:[#allocation5 + $0x5c] sm:$0xf]
    %v711 = vld [vmem:[#allocation5 + $0x60] sm:$0xf]
    %v712 = vld [vmem:[#allocation5 + $0x64] sm:$0xf]
    %v713 = vld [vmem:[#allocation5 + $0x68] sm:$0xf]
    %v714 = vld [vmem:[#allocation5 + $0x6c] sm:$0xf]
    %v715 = vld [vmem:[#allocation5 + $0x70] sm:$0xf]
    %v716 = vld [vmem:[#allocation5 + $0x74] sm:$0xf]
    %v717 = vld [vmem:[#allocation5 + $0x78] sm:$0xf]
    %v718 = vld [vmem:[#allocation5 + $0x7c] sm:$0xf]
    %v719 = vld [vmem:[%s6] sm:$0x1]
    %v721 = vlaneseq
    %v722 = vshrl.u32 %v721, 7
    %v723 = vsub.s32 0, %v722
    %v724 = vrot.slane %v719, %v723
    %v758 = vunpack.c.l.b16 %v687
    %v759 = vunpack.c.l.b16 %v688
    %v760 = vunpack.c.l.b16 %v689
    %v761 = vunpack.c.l.b16 %v690
    %v762 = vunpack.c.l.b16 %v691
    %v763 = vunpack.c.l.b16 %v692
    %v764 = vunpack.c.l.b16 %v693
    %v765 = vunpack.c.l.b16 %v694
    %v766 = vunpack.c.l.b16 %v695
    %v767 = vunpack.c.l.b16 %v696
    %v768 = vunpack.c.l.b16 %v697
    %v769 = vunpack.c.l.b16 %v698
    %v770 = vunpack.c.l.b16 %v699
    %v771 = vunpack.c.l.b16 %v700
    %v772 = vunpack.c.l.b16 %v701
    %v773 = vunpack.c.l.b16 %v702
    %v774 = vunpack.c.l.b16 %v703
    %v775 = vunpack.c.l.b16 %v704
    %v776 = vunpack.c.l.b16 %v705
    %v777 = vunpack.c.l.b16 %v706
    %v778 = vunpack.c.l.b16 %v707
    %v779 = vunpack.c.l.b16 %v708
    %v780 = vunpack.c.l.b16 %v709
    %v781 = vunpack.c.l.b16 %v710
    %v782 = vunpack.c.l.b16 %v711
    %v783 = vunpack.c.l.b16 %v712
    %v784 = vunpack.c.l.b16 %v713
    %v785 = vunpack.c.l.b16 %v714
    %v786 = vunpack.c.l.b16 %v715
    %v787 = vunpack.c.l.b16 %v716
    %v788 = vunpack.c.l.b16 %v717
    %v789 = vunpack.c.l.b16 %v718
    %v790 = vpack.c.b16 %v759, %v758
    %v791 = vpack.c.b16 %v761, %v760
    %v792 = vpack.c.b16 %v763, %v762
    %v793 = vpack.c.b16 %v765, %v764
    %v794 = vpack.c.b16 %v767, %v766
    %v795 = vpack.c.b16 %v769, %v768
    %v796 = vpack.c.b16 %v771, %v770
    %v797 = vpack.c.b16 %v773, %v772
    %v798 = vpack.c.b16 %v775, %v774
    %v799 = vpack.c.b16 %v777, %v776
    %v800 = vpack.c.b16 %v779, %v778
    %v801 = vpack.c.b16 %v781, %v780
    %v802 = vpack.c.b16 %v783, %v782
    %v803 = vpack.c.b16 %v785, %v784
    %v804 = vpack.c.b16 %v787, %v786
    %v805 = vpack.c.b16 %v789, %v788
    %822 = vmatprep.subr.bf16.mxu0 0
    %823 = vmatpush1.bf16.msra.mxu0 %v797
    %824 = vmatprep.subr.bf16.mxu0 0
    %825 = vmatpush1.bf16.msra.mxu0 %v796
    %826 = vmatprep.subr.bf16.mxu0 0
    %827 = vmatpush1.bf16.msra.mxu0 %v795
    %828 = vmatprep.subr.bf16.mxu0 0
    %829 = vmatpush1.bf16.msra.mxu0 %v794
    %830 = vmatprep.subr.bf16.mxu0 0
    %831 = vmatpush1.bf16.msra.mxu0 %v793
    %832 = vmatprep.subr.bf16.mxu0 0
    %833 = vmatpush1.bf16.msra.mxu0 %v792
    %834 = vmatprep.subr.bf16.mxu0 0
    %835 = vmatpush1.bf16.msra.mxu0 %v791
    %836 = vmatprep.subr.bf16.mxu0 0
    %837 = vmatpush1.bf16.msra.mxu0 %v790
    %838 = vmatprep.subr.bf16.mxu0 0
    %839 = vmatpush2.bf16.msra.mxu0 %v805
    %840 = vmatprep.subr.bf16.mxu0 0
    %841 = vmatpush2.bf16.msra.mxu0 %v804
    %842 = vmatprep.subr.bf16.mxu0 0
    %843 = vmatpush2.bf16.msra.mxu0 %v803
    %844 = vmatprep.subr.bf16.mxu0 0
    %845 = vmatpush2.bf16.msra.mxu0 %v802
    %846 = vmatprep.subr.bf16.mxu0 0
    %847 = vmatpush2.bf16.msra.mxu0 %v801
    %848 = vmatprep.subr.bf16.mxu0 0
    %849 = vmatpush2.bf16.msra.mxu0 %v800
    %850 = vmatprep.subr.bf16.mxu0 0
    %851 = vmatpush2.bf16.msra.mxu0 %v799
    %852 = vmatprep.subr.bf16.mxu0 0
    %853 = vmatpush2.bf16.msra.mxu0 %v798
    %854 = vmatprep.mubr.bf16.mxu0 %v672
    %855 = vmatmul.mubr.bf16.gmra.mxu0 %v671
    %v856 = vpop.f32.mrf.mxu0
    %v857 = vadd.f32 %v724, %v856
    %v858 = vpop.f32.mrf.mxu0
    %v859 = vpop.f32.mrf.mxu0
    %v860 = vadd.f32 %v724, %v859
    %v861 = vpop.f32.mrf.mxu0
    %862 = vmatprep.mubr.bf16.mxu0 %v674
    %863 = vmatmul.mubr.bf16.gmra.mxu0 %v673
    %v864 = vpop.f32.mrf.mxu0
    %v865 = vadd.f32 %v724, %v864
    %v866 = vpop.f32.mrf.mxu0
    %v867 = vpop.f32.mrf.mxu0
    %v868 = vadd.f32 %v724, %v867
    %v869 = vpop.f32.mrf.mxu0
    %870 = vmatprep.mubr.bf16.mxu0 %v676
    %871 = vmatmul.mubr.bf16.gmra.mxu0 %v675
    %v872 = vpop.f32.mrf.mxu0
    %v873 = vadd.f32 %v724, %v872
    %v874 = vpop.f32.mrf.mxu0
    %v875 = vpop.f32.mrf.mxu0
    %v876 = vadd.f32 %v724, %v875
    %v877 = vpop.f32.mrf.mxu0
    %878 = vmatprep.mubr.bf16.mxu0 %v678
    %879 = vmatmul.mubr.bf16.gmra.mxu0 %v677
    %v880 = vpop.f32.mrf.mxu0
    %v881 = vadd.f32 %v724, %v880
    %v882 = vpop.f32.mrf.mxu0
    %v883 = vpop.f32.mrf.mxu0
    %v884 = vadd.f32 %v724, %v883
    %v885 = vpop.f32.mrf.mxu0
    %886 = vmatprep.mubr.bf16.mxu0 %v680
    %887 = vmatmul.mubr.bf16.gmra.mxu0 %v679
    %v888 = vpop.f32.mrf.mxu0
    %v889 = vadd.f32 %v724, %v888
    %v890 = vpop.f32.mrf.mxu0
    %v891 = vpop.f32.mrf.mxu0
    %v892 = vadd.f32 %v724, %v891
    %v893 = vpop.f32.mrf.mxu0
    %894 = vmatprep.mubr.bf16.mxu0 %v682
    %895 = vmatmul.mubr.bf16.gmra.mxu0 %v681
    %v896 = vpop.f32.mrf.mxu0
    %v897 = vadd.f32 %v724, %v896
    %v898 = vpop.f32.mrf.mxu0
    %v899 = vpop.f32.mrf.mxu0
    %v900 = vadd.f32 %v724, %v899
    %v901 = vpop.f32.mrf.mxu0
    %902 = vmatprep.mubr.bf16.mxu0 %v684
    %903 = vmatmul.mubr.bf16.gmra.mxu0 %v683
    %v904 = vpop.f32.mrf.mxu0
    %v905 = vadd.f32 %v724, %v904
    %v906 = vpop.f32.mrf.mxu0
    %v907 = vpop.f32.mrf.mxu0
    %v908 = vadd.f32 %v724, %v907
    %v909 = vpop.f32.mrf.mxu0
    %910 = vmatprep.mubr.bf16.mxu0 %v686
    %911 = vmatmul.mubr.bf16.gmra.mxu0 %v685
    %v912 = vpop.f32.mrf.mxu0
    %v913 = vadd.f32 %v724, %v912
    %v914 = vpop.f32.mrf.mxu0
    %v915 = vpop.f32.mrf.mxu0
    %v916 = vadd.f32 %v724, %v915
    %v917 = vpop.f32.mrf.mxu0
    %918 = vdwg.mxu0
    %v919 = vtanh.pop %v857
    %v920 = vtanh.pop %v860
    %v921 = vtanh.pop %v865
    %v922 = vtanh.pop %v868
    %v923 = vtanh.pop %v873
    %v924 = vtanh.pop %v876
    %v925 = vtanh.pop %v881
    %v926 = vtanh.pop %v884
    %v927 = vtanh.pop %v889
    %v928 = vtanh.pop %v892
    %v929 = vtanh.pop %v897
    %v930 = vtanh.pop %v900
    %v931 = vtanh.pop %v905
    %v932 = vtanh.pop %v908
    %v933 = vtanh.pop %v913
    %v934 = vtanh.pop %v916
    %v935 = vpack.c.bf16 %v920, %v919
    %v936 = vpack.c.bf16 %v922, %v921
    %v937 = vpack.c.bf16 %v924, %v923
    %v938 = vpack.c.bf16 %v926, %v925
    %v939 = vpack.c.bf16 %v928, %v927
    %v940 = vpack.c.bf16 %v930, %v929
    %v941 = vpack.c.bf16 %v932, %v931
    %v942 = vpack.c.bf16 %v934, %v933
    %v951 = vunpack.c.l.b16 %v935
    %v952 = vunpack.c.h.b16 %v935
    %v953 = vunpack.c.l.b16 %v936
    %v954 = vunpack.c.h.b16 %v936
    %v955 = vunpack.c.l.b16 %v937
    %v956 = vunpack.c.h.b16 %v937
    %v957 = vunpack.c.l.b16 %v938
    %v958 = vunpack.c.h.b16 %v938
    %v959 = vunpack.c.l.b16 %v939
    %v960 = vunpack.c.h.b16 %v939
    %v961 = vunpack.c.l.b16 %v940
    %v962 = vunpack.c.h.b16 %v940
    %v963 = vunpack.c.l.b16 %v941
    %v964 = vunpack.c.h.b16 %v941
    %v965 = vunpack.c.l.b16 %v942
    %v966 = vunpack.c.h.b16 %v942
    %v967 = vpack.c.b16 %v951, %v951
    %v968 = vpack.c.b16 %v952, %v952
    %v969 = vpack.c.b16 %v953, %v953
    %v970 = vpack.c.b16 %v954, %v954
    %v971 = vpack.c.b16 %v955, %v955
    %v972 = vpack.c.b16 %v956, %v956
    %v973 = vpack.c.b16 %v957, %v957
    %v974 = vpack.c.b16 %v958, %v958
    %v975 = vpack.c.b16 %v959, %v959
    %v976 = vpack.c.b16 %v960, %v960
    %v977 = vpack.c.b16 %v961, %v961
    %v978 = vpack.c.b16 %v962, %v962
    %v979 = vpack.c.b16 %v963, %v963
    %v980 = vpack.c.b16 %v964, %v964
    %v981 = vpack.c.b16 %v965, %v965
    %v982 = vpack.c.b16 %v966, %v966
    %999 = vst [vmem:[#allocation7] sm:$0xf] %v967
    %1000 = vst [vmem:[#allocation7 + $0x4] sm:$0xf] %v968
    %1001 = vst [vmem:[#allocation7 + $0x8] sm:$0xf] %v969
    %1002 = vst [vmem:[#allocation7 + $0xc] sm:$0xf] %v970
    %1003 = vst [vmem:[#allocation7 + $0x10] sm:$0xf] %v971
    %1004 = vst [vmem:[#allocation7 + $0x14] sm:$0xf] %v972
    %1005 = vst [vmem:[#allocation7 + $0x18] sm:$0xf] %v973
    %1006 = vst [vmem:[#allocation7 + $0x1c] sm:$0xf] %v974
    %1007 = vst [vmem:[#allocation7 + $0x20] sm:$0xf] %v975
    %1008 = vst [vmem:[#allocation7 + $0x24] sm:$0xf] %v976
    %1009 = vst [vmem:[#allocation7 + $0x28] sm:$0xf] %v977
    %1010 = vst [vmem:[#allocation7 + $0x2c] sm:$0xf] %v978
    %1011 = vst [vmem:[#allocation7 + $0x30] sm:$0xf] %v979
    %1012 = vst [vmem:[#allocation7 + $0x34] sm:$0xf] %v980
    %1013 = vst [vmem:[#allocation7 + $0x38] sm:$0xf] %v981
    %1014 = vst [vmem:[#allocation7 + $0x3c] sm:$0xf] %v982
    // Predicated region
    $region38: #{actor_forward_padded.1} parent=1 // pred_check
      _
    $region39: #{actor_forward_padded.1} parent=1 // pred_check_branch
      %1016 = sbr.rel (0) target = $region41
    $region40: #{actor_forward_padded.1} parent=1 // pred_region
      %s1018 = ssub.s32 1024, 1024
      %1019 = vsyncadd [#allocation4], %s1018
      %s1020 = sshll.u32 [#allocation7], 4
      %s1021 = int_to_ptr.vmem [resolvable:$true] %s1020
      %1026 = dma.vmem_to_hbm [thread:$0]  %s1021, 1024, %s7, [#allocation4], 64, 64, 4
    $region41: #{actor_forward_padded.1} parent=1 // pred_fallthru
      _
    // Predicated region
    $region42: #{actor_forward_padded.1} parent=1 // pred_check
      _
    $region43: #{actor_forward_padded.1} parent=1 // pred_check_branch
      %1028 = sbr.rel (0) target = $region45
    $region44: #{actor_forward_padded.1} parent=1 // pred_region
      %1029 = dma.done [#allocation4], 1024
    $region45: #{actor_forward_padded.1} parent=1 // pred_fallthru
      _
    %1030 = vsyncpa [#allocation3], 1
    %1031 = vsyncpa [#allocation6], 1
    %1032 = vsyncpa [#allocation4], 1

</llo_original>
